<compile_context>
chip_gen: v7x
topology: tpu7x:2x2x1
jax: 0.10.0
libtpu: 0.0.40
codegen_flags: <defaults>
</compile_context>

<pallas_src>
import jax
import jax.numpy as jnp
from jax.experimental import pallas as pl
from jax.experimental.pallas import tpu as pltpu

# --- constants implied by the module (synthetic, deterministic) ---------------
NUM_ACT_BOND_TYPES = 4      # number of active bond types (heads)
MAX_VALENCE = 6             # TMCfg.max_valence
VALENCE_DIM = MAX_VALENCE + 1


def _valence_kernel(x_ref, w_ref, b_ref, o_ref):
    # x_ref: (tn, H)   w_ref: (H, T*V)   b_ref: (1, T*V)   o_ref: (tn, T*V)
    y = jnp.dot(x_ref[...], w_ref[...], preferred_element_type=jnp.float32)
    o_ref[...] = (y + b_ref[...].astype(jnp.float32)).astype(o_ref.dtype)


def valence_decoder(x, weights, biases, *, tile_n=1024):
    """x: [B, S, H]; weights: [T, H, V]; biases: [T, V] -> [B, S, T, V]."""
    B, S, H = x.shape
    T, _, V = weights.shape
    TV = T * V
    N = B * S

    # Fuse heads: column t*V + v of W_all is head t, class v (matches cat(-2)).
    w_all = jnp.transpose(weights, (1, 0, 2)).reshape(H, TV).astype(x.dtype)
    b_all = biases.reshape(1, TV).astype(x.dtype)

    x2d = x.reshape(N, H)

    # Token-axis tile: multiple of 8 (sublane), bounded by the requested tile,
    # the (rounded-up) row count, and a VMEM budget for the double-buffered
    # x tile + output tile (weights/bias are tiny and resident).
    itemsize = jnp.dtype(x.dtype).itemsize
    per_row_bytes = 2 * (H + TV) * itemsize          # 2x for double buffering
    vmem_budget = 10 << 20                           # leave headroom in scoped VMEM
    cap = max(8, (vmem_budget // per_row_bytes) // 8 * 8)
    tn = min(tile_n, cap, (N + 7) // 8 * 8)
    tn = max(8, (tn // 8) * 8)

    grid_n = pl.cdiv(N, tn)

    out2d = pl.pallas_call(
        _valence_kernel,
        out_shape=jax.ShapeDtypeStruct((N, TV), x.dtype),
        grid_spec=pltpu.PrefetchScalarGridSpec(
            num_scalar_prefetch=0,
            grid=(grid_n,),
            in_specs=[
                pl.BlockSpec((tn, H), lambda n: (n, 0)),   # x tile (streamed)
                pl.BlockSpec((H, TV), lambda n: (0, 0)),   # fused weights (resident)
                pl.BlockSpec((1, TV), lambda n: (0, 0)),   # fused bias (resident)
            ],
            out_specs=pl.BlockSpec((tn, TV), lambda n: (n, 0)),
        ),
        compiler_params=pltpu.CompilerParams(
            dimension_semantics=("parallel",),   # shard row tiles across TCs
            vmem_limit_bytes=32 << 20,
        ),
    )(x2d, w_all, b_all)

    # [N, T*V] -> [B, S, T, V] is a free reshape (T, V contiguous), no transpose.
    return out2d.reshape(B, S, T, V)


def init_params(key, hidden_size, dtype=jnp.float32):
    """Deterministic nn.Linear-style init: U(-1/sqrt(H), 1/sqrt(H))."""
    kw, kb = jax.random.split(key)
    bound = 1.0 / jnp.sqrt(float(hidden_size))
    weights = jax.random.uniform(
        kw, (NUM_ACT_BOND_TYPES, hidden_size, VALENCE_DIM),
        minval=-bound, maxval=bound, dtype=dtype)
    biases = jax.random.uniform(
        kb, (NUM_ACT_BOND_TYPES, VALENCE_DIM),
        minval=-bound, maxval=bound, dtype=dtype)
    return weights, biases


if __name__ == "__main__":
    key = jax.random.PRNGKey(0)
    k_x, k_p = jax.random.split(key)

    B, S, H = 2, 8, 32
    x = jax.random.normal(k_x, (B, S, H), dtype=jnp.float32)
    weights, biases = init_params(k_p, H)

    out = valence_decoder(x, weights, biases)
    out = jax.block_until_ready(out)

    # reference check in plain JAX (same math as the torch module)
    ref = jnp.stack(
        [x @ weights[i] + biases[i] for i in range(NUM_ACT_BOND_TYPES)],
        axis=-2,
    )
    assert out.shape == (B, S, NUM_ACT_BOND_TYPES, VALENCE_DIM), out.shape
    assert jnp.allclose(out, ref, atol=1e-5, rtol=1e-5)

    print("KERNEL_OK")
</pallas_src>

<mosaic_0001>
module attributes {stable_mosaic.version = 11 : i64} {
  func.func @_valence_kernel(%arg0: i32, %arg1: memref<16x32xf32, #tpu.memory_space<vmem>>, %arg2: memref<32x28xf32, #tpu.memory_space<vmem>>, %arg3: memref<1x28xf32, #tpu.memory_space<vmem>>, %arg4: memref<16x28xf32, #tpu.memory_space<vmem>>) attributes {dimension_semantics = [#tpu.dimension_semantics<parallel>], iteration_bounds = array<i64: 1>, scalar_prefetch = 0 : i64, scratch_operands = 0 : i64, tpu.core_type = #tpu.core_type<tc>, window_params = [{transform_indices = @transform_0, window_bounds = array<i64: 16, 32>}, {pipeline_mode = #tpu.pipeline_mode<synchronous>, transform_indices = @transform_1, window_bounds = array<i64: 32, 28>}, {pipeline_mode = #tpu.pipeline_mode<synchronous>, transform_indices = @transform_2, window_bounds = array<i64: 1, 28>}, {transform_indices = @transform_3, window_bounds = array<i64: 16, 28>}]} {
    %c0 = arith.constant 0 : index
    %c0_0 = arith.constant 0 : index
    %0 = vector.load %arg1[%c0, %c0_0] : memref<16x32xf32, #tpu.memory_space<vmem>>, vector<16x32xf32>
    %c0_1 = arith.constant 0 : index
    %c0_2 = arith.constant 0 : index
    %1 = vector.load %arg2[%c0_1, %c0_2] : memref<32x28xf32, #tpu.memory_space<vmem>>, vector<32x28xf32>
    %cst = arith.constant dense<0.000000e+00> : vector<16x28xf32>
    %2 = tpu.matmul %0, %1, %cst {dimension_numbers = #tpu.dot_dimension_numbers<[1], [0], [0], [1], [0, 0, 1, 1], [], []>} : vector<16x32xf32>, vector<32x28xf32>, vector<16x28xf32> -> vector<16x28xf32>
    %c0_3 = arith.constant 0 : index
    %c0_4 = arith.constant 0 : index
    %3 = vector.load %arg3[%c0_3, %c0_4] : memref<1x28xf32, #tpu.memory_space<vmem>>, vector<1x28xf32>
    %4 = vector.broadcast %3 : vector<1x28xf32> to vector<16x28xf32>
    %5 = arith.addf %2, %4 : vector<16x28xf32>
    %c0_5 = arith.constant 0 : index
    %c0_6 = arith.constant 0 : index
    %6 = vector.load %arg4[%c0_5, %c0_6] : memref<16x28xf32, #tpu.memory_space<vmem>>, vector<16x28xf32>
    tpu.vector_store %arg4[%c0_5, %c0_6], %5 {strides = array<i32>} : memref<16x28xf32, #tpu.memory_space<vmem>>, vector<16x28xf32>,
    return
  }
  func.func @transform_0(%arg0: i32) -> (i32, i32) {
    %c0_i32 = arith.constant 0 : i32
    %c0_i32_0 = arith.constant 0 : i32
    return %arg0, %c0_i32 : i32, i32
  }
  func.func @transform_1(%arg0: i32) -> (i32, i32) {
    %c0_i32 = arith.constant 0 : i32
    %c0_i32_0 = arith.constant 0 : i32
    %c0_i32_1 = arith.constant 0 : i32
    return %c0_i32, %c0_i32_0 : i32, i32
  }
  func.func @transform_2(%arg0: i32) -> (i32, i32) {
    %c0_i32 = arith.constant 0 : i32
    %c0_i32_0 = arith.constant 0 : i32
    %c0_i32_1 = arith.constant 0 : i32
    return %c0_i32, %c0_i32_0 : i32, i32
  }
  func.func @transform_3(%arg0: i32) -> (i32, i32) {
    %c0_i32 = arith.constant 0 : i32
    %c0_i32_0 = arith.constant 0 : i32
    return %arg0, %c0_i32 : i32, i32
  }
}

</mosaic_0001>

<llo_original>
// kernel: tpu_custom_call.1
$region0: #{tpu_custom_call.1}
  #allocation0 [shape = 'u32[]', space=smem, size = 0x4, offset = 0x4, fixed_abs, tag = 'smem constant byte address 0x4 - core index']
  #allocation1 [shape = 'u32[144,128]{1,0:T(1,128)}', space=vmem, size = 0x12000, scoped, tag = 'internal scratch']
  %s0 = inlined_call_operand.hbm [shape: f32[16,32], index: 0, kind: input, shape index: {}]
  %s1 = inlined_call_operand.hbm [shape: f32[32,28], index: 1, kind: input, shape index: {}]
  %s2 = inlined_call_operand.vmem [shape: f32[1,28], index: 2, kind: input, shape index: {}]
  %s3 = inlined_call_operand.hbm [shape: f32[16,28], index: 3, kind: output, shape index: {}]
  %s4 = sld [smem:[#allocation0]]
  $region30: #{tpu_custom_call.1} parent=0
    _
  %s6 = ssub.s32 1, %s4
  %s7 = scalar_select 0, %s6, %s4
  $region1: #{tpu_custom_call.1} parent=0
    #allocation2 [shape = 'u8[8192]{0}', space=vmem, size = 0x2000, scoped, tag = 'input window, operand 0, single buffered']
    #allocation3 [shape = 's32[1]{0}', space=sflag, size = 0x4, scoped, tag = 'scoped memory for tpu_custom_call.1']
    #allocation4 [shape = 's32[1]{0}', space=sflag, size = 0x4, scoped, tag = 'scoped memory for tpu_custom_call.1']
    #allocation5 [shape = 'u8[16384]{0}', space=vmem, size = 0x4000, scoped, tag = 'input window, operand 1, single buffered']
    #allocation6 [shape = 's32[1]{0}', space=sflag, size = 0x4, scoped, tag = 'scoped memory for tpu_custom_call.1']
    #allocation7 [shape = 'u8[8192]{0}', space=vmem, size = 0x2000, scoped, tag = 'output window, operand 0, single buffered']
    %8 = vsyncpa [#allocation3], 0
    %9 = vsyncpa [#allocation6], 0
    %10 = vsyncpa [#allocation4], 0
    // Predicated region
    $region2: #{tpu_custom_call.1} parent=1 // pred_check
      _
    $region3: #{tpu_custom_call.1} parent=1 // pred_check_branch
      %12 = sbr.rel (0) target = $region5
    $region4: #{tpu_custom_call.1} parent=1 // pred_region
      %s14 = ssub.s32 256, 256
      %15 = vsyncadd [#allocation3], %s14
      %s16 = sshll.u32 [#allocation2], 4
      %s17 = int_to_ptr.vmem [resolvable:$true] %s16
      %22 = dma.hbm_to_vmem [thread:$0]  %s0, 256, %s17, [#allocation3], 128, 128, 8
    $region5: #{tpu_custom_call.1} parent=1 // pred_fallthru
      _
    // Predicated region
    $region6: #{tpu_custom_call.1} parent=1 // pred_check
      _
    $region7: #{tpu_custom_call.1} parent=1 // pred_check_branch
      %24 = sbr.rel (0) target = $region9
    $region8: #{tpu_custom_call.1} parent=1 // pred_region
      %s26 = ssub.s32 512, 512
      %27 = vsyncadd [#allocation6], %s26
      %s28 = sshll.u32 [#allocation5], 4
      %s29 = int_to_ptr.vmem [resolvable:$true] %s28
      %34 = dma.hbm_to_vmem [thread:$0]  %s1, 512, %s29, [#allocation6], 128, 128, 8
    $region9: #{tpu_custom_call.1} parent=1 // pred_fallthru
      _
    // Predicated region
    $region10: #{tpu_custom_call.1} parent=1 // pred_check
      _
    $region11: #{tpu_custom_call.1} parent=1 // pred_check_branch
      %36 = sbr.rel (0) target = $region13
    $region12: #{tpu_custom_call.1} parent=1 // pred_region
      _
    $region13: #{tpu_custom_call.1} parent=1 // pred_fallthru
      _
    // Predicated region
    $region14: #{tpu_custom_call.1} parent=1 // pred_check
      _
    $region15: #{tpu_custom_call.1} parent=1 // pred_check_branch
      %38 = sbr.rel (0) target = $region17
    $region16: #{tpu_custom_call.1} parent=1 // pred_region
      %39 = dma.done [#allocation3], 256
    $region17: #{tpu_custom_call.1} parent=1 // pred_fallthru
      _
    // Predicated region
    $region18: #{tpu_custom_call.1} parent=1 // pred_check
      _
    $region19: #{tpu_custom_call.1} parent=1 // pred_check_branch
      %41 = sbr.rel (0) target = $region21
    $region20: #{tpu_custom_call.1} parent=1 // pred_region
      %42 = dma.done [#allocation6], 512
    $region21: #{tpu_custom_call.1} parent=1 // pred_fallthru
      _
    %v43 = vld [vmem:[#allocation2] sm:$0xff]
    %v44 = vld [vmem:[#allocation2 + $0x8] sm:$0xff]
    %v45 = vld [vmem:[#allocation5] sm:$0xff]
    %v46 = vld [vmem:[#allocation5 + $0x8] sm:$0xff]
    %v47 = vld [vmem:[#allocation5 + $0x10] sm:$0xff]
    %v48 = vld [vmem:[#allocation5 + $0x18] sm:$0xff]
    %v49 = vld [vmem:[%s2] sm:$0x1]
    %v51 = vlaneseq
    %v52 = vshrl.u32 %v51, 7
    %v53 = vsub.s32 0, %v52
    %v54 = vrot.slane %v49, %v53
    %vm56 = vcmask 261120
    %v58 = vsel %vm56, %v43, 0
    %v61 = vsel %vm56, %v44, 0
    %63 = vmatprep.subr.mxu0 0.0
    %64 = vmatpush1.msra.mxu0 %v45
    %65 = vmatprep.subr.mxu0 0.0
    %66 = vmatpush1.msra.mxu0 %v46
    %67 = vmatprep.subr.mxu0 0.0
    %68 = vmatpush1.msra.mxu0 %v47
    %69 = vmatprep.subr.mxu0 0.0
    %70 = vmatpush1.msra.mxu0 %v48
    %71 = vmatprep.subr.mxu0 0.0
    %72 = vmatpush1.msra.mxu0 0.0
    %73 = vmatprep.subr.mxu0 0.0
    %74 = vmatpush1.msra.mxu0 0.0
    %75 = vmatprep.subr.mxu0 0.0
    %76 = vmatpush1.msra.mxu0 0.0
    %77 = vmatprep.subr.mxu0 0.0
    %78 = vmatpush1.msra.mxu0 0.0
    %79 = vmatprep.subr.mxu0 0.0
    %80 = vmatpush1.msra.mxu0 0.0
    %81 = vmatprep.subr.mxu0 0.0
    %82 = vmatpush1.msra.mxu0 0.0
    %83 = vmatprep.subr.mxu0 0.0
    %84 = vmatpush1.msra.mxu0 0.0
    %85 = vmatprep.subr.mxu0 0.0
    %86 = vmatpush1.msra.mxu0 0.0
    %87 = vmatprep.subr.mxu0 0.0
    %88 = vmatpush1.msra.mxu0 0.0
    %89 = vmatprep.subr.mxu0 0.0
    %90 = vmatpush1.msra.mxu0 0.0
    %91 = vmatprep.subr.mxu0 0.0
    %92 = vmatpush1.msra.mxu0 0.0
    %93 = vmatprep.subr.mxu0 0.0
    %94 = vmatpush1.msra.mxu0 0.0
    %95 = vmatprep.subr.mxu0 0.0
    %96 = vmatpush1.msra.mxu0 0.0
    %97 = vmatprep.subr.mxu0 0.0
    %98 = vmatpush1.msra.mxu0 0.0
    %99 = vmatprep.subr.mxu0 0.0
    %100 = vmatpush1.msra.mxu0 0.0
    %101 = vmatprep.subr.mxu0 0.0
    %102 = vmatpush1.msra.mxu0 0.0
    %103 = vmatprep.subr.mxu0 0.0
    %104 = vmatpush1.msra.mxu0 0.0
    %105 = vmatprep.subr.mxu0 0.0
    %106 = vmatpush1.msra.mxu0 0.0
    %107 = vmatprep.subr.mxu0 0.0
    %108 = vmatpush1.msra.mxu0 0.0
    %109 = vmatprep.subr.mxu0 0.0
    %110 = vmatpush1.msra.mxu0 0.0
    %111 = vmatprep.subr.mxu0 0.0
    %112 = vmatpush1.msra.mxu0 0.0
    %113 = vmatprep.subr.mxu0 0.0
    %114 = vmatpush1.msra.mxu0 0.0
    %115 = vmatprep.subr.mxu0 0.0
    %116 = vmatpush1.msra.mxu0 0.0
    %117 = vmatprep.subr.mxu0 0.0
    %118 = vmatpush1.msra.mxu0 0.0
    %119 = vmatprep.subr.mxu0 0.0
    %120 = vmatpush1.msra.mxu0 0.0
    %121 = vmatprep.subr.mxu0 0.0
    %122 = vmatpush1.msra.mxu0 0.0
    %123 = vmatprep.subr.mxu0 0.0
    %124 = vmatpush1.msra.mxu0 0.0
    %125 = vmatprep.subr.mxu0 0.0
    %126 = vmatpush1.msra.mxu0 0.0
    %127 = vmatprep.mubr.f32.mxu0 0.0
    %128 = vmatmul.mubr.f32.gmra.mrb[0].mxu0 %v58
    %v129 = vpop.f32.mrb[0].mxu0
    %v130 = vadd.f32 %v54, %v129
    %v131 = vpop.f32.mrb[0].mxu0
    %132 = vmatprep.mubr.f32.mxu0 0.0
    %133 = vmatmul.mubr.f32.gmra.mrb[0].mxu0 %v61
    %v134 = vpop.f32.mrb[0].mxu0
    %v135 = vadd.f32 %v54, %v134
    %v136 = vpop.f32.mrb[0].mxu0
    %137 = vdwg.mxu0
    %vm138 = vcmask 228352
    %139 = vst.msk [vmem:[#allocation7] sm:$0xff] %vm138, %v130
    %140 = vst.msk [vmem:[#allocation7 + $0x8] sm:$0xff] %vm138, %v135
    // Predicated region
    $region22: #{tpu_custom_call.1} parent=1 // pred_check
      _
    $region23: #{tpu_custom_call.1} parent=1 // pred_check_branch
      %142 = sbr.rel (0) target = $region25
    $region24: #{tpu_custom_call.1} parent=1 // pred_region
      %s144 = ssub.s32 256, 256
      %145 = vsyncadd [#allocation4], %s144
      %s146 = sshll.u32 [#allocation7], 4
      %s147 = int_to_ptr.vmem [resolvable:$true] %s146
      %152 = dma.vmem_to_hbm [thread:$0]  %s147, 256, %s3, [#allocation4], 128, 128, 8
    $region25: #{tpu_custom_call.1} parent=1 // pred_fallthru
      _
    // Predicated region
    $region26: #{tpu_custom_call.1} parent=1 // pred_check
      _
    $region27: #{tpu_custom_call.1} parent=1 // pred_check_branch
      %154 = sbr.rel (0) target = $region29
    $region28: #{tpu_custom_call.1} parent=1 // pred_region
      %155 = dma.done [#allocation4], 256
    $region29: #{tpu_custom_call.1} parent=1 // pred_fallthru
      _
    %156 = vsyncpa [#allocation3], 1
    %157 = vsyncpa [#allocation6], 1
    %158 = vsyncpa [#allocation4], 1

</llo_original>
